<compile_context>
chip_gen: v7x
topology: tpu7x:2x2x1
jax: 0.10.0
libtpu: 0.0.40
codegen_flags: <defaults>
</compile_context>

<pallas_src>
import functools
import math

import jax
import jax.numpy as jnp
from jax.experimental import pallas as pl
from jax.experimental.pallas import tpu as pltpu

_LANE = 128
_VMEM_LIMIT = 56 * 1024 * 1024       # <= v7x 64 MiB physical per TensorCore
_MAX_NODE_TILE = 1024                # 2048 is fine on v5e/v6e (128 MiB VMEM)


def _round_up(n, m):
    return ((n + m - 1) // m) * m


def _pad2(a, rows, cols):
    r, c = a.shape
    return jnp.pad(a, ((0, rows - r), (0, cols - c)))


def _choose_node_tiling(n, max_tile=_MAX_NODE_TILE):
    """Pick the adjacency tile (and padded node count).

    Prefers large tiles (amortize ~0.35us fixed grid-step overhead, hit HBM
    roofline) but penalizes padding of the O(N^2) adjacency stream. The fixed
    per-step overhead is modeled as ~512 KiB of equivalent HBM traffic.
    """
    base = _round_up(max(n, _LANE), _LANE)
    step_overhead_bytes = 512 * 1024
    best = None
    for t in range(_LANE, min(max_tile, base) + 1, _LANE):
        np_t = _round_up(base, t)
        n_steps = (np_t // t) ** 2
        cost = n_steps * max(t * t * 2, step_overhead_bytes)   # bf16 bytes
        if best is None or cost <= best[0]:                    # tie -> larger tile
            best = (cost, t, np_t)
    return best[1], best[2]


# --------------------------------------------------------------------------
# Kernels
# --------------------------------------------------------------------------
def _init_kernel(x_ref, w_ref, b_ref, h_ref):
    """h0 = relu(x @ W_init + b_init), emitted in bf16 (serves as init_x too)."""
    h = jnp.dot(x_ref[...], w_ref[...], preferred_element_type=jnp.float32)
    h_ref[...] = jnp.maximum(h + b_ref[...], 0.0).astype(h_ref.dtype)


def _layers_kernel(beta_ref, adj_ref, init_ref, w_ref, out_ref,
                   h_scratch, acc_ref, *, alpha, tm, tk):
    """All ScaleGConv layers fused: grid = (layer, row_tile, col_tile).

    h lives in a double-buffered VMEM scratch: layer l reads slot (l+1)%2 and
    writes slot l%2 (slot 1 is primed with init_x before layer 0).
    """
    l = pl.program_id(0)
    i = pl.program_id(1)
    k = pl.program_id(2)
    nk = pl.num_programs(2)

    # Prime the "previous layer" slot with init_x once, at the very first step.
    @pl.when((l == 0) & (i == 0) & (k == 0))
    def _():
        h_scratch[1, :, :] = init_ref[...]

    @pl.when(k == 0)
    def _():
        acc_ref[...] = jnp.zeros_like(acc_ref)

    # agg += A_hat[row_tile, col_tile] @ h[col_block, :]   (bf16 in, f32 acc)
    col = pl.multiple_of(k * tk, tk)
    h_cols = h_scratch[(l + 1) % 2, pl.ds(col, tk), :]
    acc_ref[...] += jnp.dot(adj_ref[...], h_cols,
                            preferred_element_type=jnp.float32)

    @pl.when(k == nk - 1)
    def _():
        row = pl.multiple_of(i * tm, tm)
        beta = beta_ref[l]                                   # SMEM scalar
        init_rows = init_ref[pl.ds(row, tm), :].astype(jnp.float32)
        support = (1.0 - alpha) * acc_ref[...] + alpha * init_rows
        wmix = jnp.dot(support.astype(jnp.bfloat16), w_ref[0],
                       preferred_element_type=jnp.float32)
        h_new = jnp.maximum((1.0 - beta) * support + beta * wmix,
                            0.0).astype(jnp.bfloat16)
        h_scratch[l % 2, pl.ds(row, tm), :] = h_new          # next layer's input
        out_ref[...] = h_new                                 # final layer's result


def _final_kernel(h_ref, w_ref, b_ref, out_ref, *, num_classes, use_softmax):
    """Final linear + (optional) log_softmax over a 128-padded class dim."""
    logits = jnp.dot(h_ref[...], w_ref[...],
                     preferred_element_type=jnp.float32) + b_ref[...]
    if not use_softmax:
        out_ref[...] = logits
        return
    lane = jax.lax.broadcasted_iota(jnp.int32, logits.shape, 1)
    logits = jnp.where(lane < num_classes, logits, -1e30)    # mask padded classes
    m = jnp.max(logits, axis=1, keepdims=True)
    z = logits - m
    lse = jnp.log(jnp.sum(jnp.exp(z), axis=1, keepdims=True))
    out_ref[...] = z - lse


# --------------------------------------------------------------------------
# Wrapper
# --------------------------------------------------------------------------
def scale_gcn_forward(x, adj_hat, params, *, num_layers, alpha, beta_base,
                      fix_beta=False, use_softmax=True,
                      max_node_tile=_MAX_NODE_TILE):
    n, in_ch = x.shape
    hidden = params["w_init"].shape[1]
    out_ch = params["w_final"].shape[1]

    tile, np_ = _choose_node_tiling(n, max_node_tile)
    tm = tk = tile
    in_p = _round_up(in_ch, _LANE)
    hp = _round_up(hidden, _LANE)
    out_p = _round_up(out_ch, _LANE)

    # Zero-padding (glue). Padded adjacency rows/cols are zero, so padded nodes
    # never influence valid nodes; padded feature columns stay exactly zero.
    # (Padded node rows carry relu(b_init) through the stack, but they are
    # sliced off at the end and never mixed into valid rows.)
    x_p = _pad2(x.astype(jnp.float32), np_, in_p)
    adj_p = _pad2(adj_hat.astype(jnp.float32), np_, np_)
    w_init_p = _pad2(params["w_init"], in_p, hp)
    b_init_p = _pad2(params["b_init"], 1, hp)
    w_final_p = _pad2(params["w_final"], hp, out_p)
    b_final_p = _pad2(params["b_final"], 1, out_p)
    w_layers_p = jnp.pad(params["w_layers"],
                         ((0, 0), (0, hp - hidden), (0, hp - hidden)))

    # bf16 MXU operands (f32 accumulation inside the kernels).
    x_bf = x_p.astype(jnp.bfloat16)
    adj_bf = adj_p.astype(jnp.bfloat16)
    w_init_bf = w_init_p.astype(jnp.bfloat16)
    w_layers_bf = w_layers_p.astype(jnp.bfloat16)
    w_final_bf = w_final_p.astype(jnp.bfloat16)

    # Per-layer betas are static floats -> one small SMEM array, one kernel.
    betas = jnp.asarray(
        [float(beta_base) if fix_beta else math.log(beta_base / (i + 1) + 1.0)
         for i in range(num_layers)], dtype=jnp.float32)

    cp_1d = pltpu.CompilerParams(dimension_semantics=("parallel",),
                                 vmem_limit_bytes=_VMEM_LIMIT)
    # All axes "arbitrary": cross-layer dependency flows through per-core VMEM
    # scratch, so the row axis cannot be split across TensorCores; the kernel
    # is HBM-bound on the adjacency stream anyway.
    cp_layers = pltpu.CompilerParams(
        dimension_semantics=("arbitrary", "arbitrary", "arbitrary"),
        vmem_limit_bytes=_VMEM_LIMIT)

    # --- init layer: h0 = init_x = relu(x @ W_init + b_init) ----------------
    h = pl.pallas_call(
        _init_kernel,
        out_shape=jax.ShapeDtypeStruct((np_, hp), jnp.bfloat16),
        grid_spec=pltpu.PrefetchScalarGridSpec(
            num_scalar_prefetch=0, grid=(np_ // tm,),
            in_specs=[pl.BlockSpec((tm, in_p), lambda i: (i, 0)),
                      pl.BlockSpec((in_p, hp), lambda i: (0, 0)),
                      pl.BlockSpec((1, hp), lambda i: (0, 0))],
            out_specs=pl.BlockSpec((tm, hp), lambda i: (i, 0))),
        compiler_params=cp_1d,
    )(x_bf, w_init_bf, b_init_p)

    # --- ScaleGConv stack: single fused pallas_call over all layers ---------
    if num_layers > 0:
        h = pl.pallas_call(
            functools.partial(_layers_kernel, alpha=float(alpha), tm=tm, tk=tk),
            out_shape=jax.ShapeDtypeStruct((np_, hp), jnp.bfloat16),
            grid_spec=pltpu.PrefetchScalarGridSpec(
                num_scalar_prefetch=0,
                grid=(num_layers, np_ // tm, np_ // tk),
                in_specs=[
                    # per-layer beta scalars, resident in SMEM
                    pl.BlockSpec(memory_space=pltpu.MemorySpace.SMEM),
                    # adjacency tile, streamed / double-buffered every layer
                    pl.BlockSpec((tm, tk), lambda l, i, k: (i, k)),
                    # init_x (== h0): fully VMEM-resident, also layer-0 source
                    pl.BlockSpec((np_, hp), lambda l, i, k: (0, 0)),
                    # per-layer weight matrix, streamed one per layer
                    pl.BlockSpec((1, hp, hp), lambda l, i, k: (l, 0, 0)),
                ],
                out_specs=pl.BlockSpec((tm, hp), lambda l, i, k: (i, 0)),
                scratch_shapes=[
                    pltpu.VMEM((2, np_, hp), jnp.bfloat16),   # h double buffer
                    pltpu.VMEM((tm, hp), jnp.float32),        # f32 accumulator
                ]),
            compiler_params=cp_layers,
        )(betas, adj_bf, h, w_layers_bf)

    # --- final linear + log_softmax -----------------------------------------
    out_pad = pl.pallas_call(
        functools.partial(_final_kernel, num_classes=out_ch,
                          use_softmax=use_softmax),
        out_shape=jax.ShapeDtypeStruct((np_, out_p), jnp.float32),
        grid_spec=pltpu.PrefetchScalarGridSpec(
            num_scalar_prefetch=0, grid=(np_ // tm,),
            in_specs=[pl.BlockSpec((tm, hp), lambda i: (i, 0)),
                      pl.BlockSpec((hp, out_p), lambda i: (0, 0)),
                      pl.BlockSpec((1, out_p), lambda i: (0, 0))],
            out_specs=pl.BlockSpec((tm, out_p), lambda i: (i, 0))),
        compiler_params=cp_1d,
    )(h, w_final_bf, b_final_p)

    return out_pad[:n, :out_ch]


# --------------------------------------------------------------------------
# Glue: graph construction, params, pure-JAX reference
# --------------------------------------------------------------------------
def build_normalized_adjacency(edge_index, num_nodes):
    """Dense A_hat = D^-1/2 (A + I) D^-1/2 from edge_index [2, E] (glue)."""
    src, dst = edge_index[0], edge_index[1]
    a = jnp.zeros((num_nodes, num_nodes), jnp.float32)
    a = a.at[src, dst].set(1.0)
    a = a.at[dst, src].set(1.0)                                  # undirected
    a = jnp.maximum(a, jnp.eye(num_nodes, dtype=jnp.float32))    # dedup'd self loops
    deg = jnp.sum(a, axis=1)
    d_inv_sqrt = 1.0 / jnp.sqrt(jnp.maximum(deg, 1e-12))
    return a * d_inv_sqrt[:, None] * d_inv_sqrt[None, :]


def init_params(key, in_channels, hidden_channels, out_channels, num_layers):
    ks = jax.random.split(key, 4)
    scale_in = 1.0 / math.sqrt(in_channels)
    scale_h = 1.0 / math.sqrt(hidden_channels)
    return {
        "w_init": jax.random.uniform(ks[0], (in_channels, hidden_channels),
                                     jnp.float32, -scale_in, scale_in),
        "b_init": jax.random.uniform(ks[1], (1, hidden_channels),
                                     jnp.float32, -scale_in, scale_in),
        "w_layers": jax.random.uniform(ks[2],
                                       (num_layers, hidden_channels, hidden_channels),
                                       jnp.float32, -scale_h, scale_h),
        "w_final": jax.random.uniform(ks[3], (hidden_channels, out_channels),
                                      jnp.float32, -scale_h, scale_h),
        "b_final": jnp.zeros((1, out_channels), jnp.float32),
    }


def scale_gcn_reference(x, adj_hat, params, *, num_layers, alpha, beta_base,
                        fix_beta=False):
    """Pure-JAX f32 reference (eval mode)."""
    h = jax.nn.relu(x @ params["w_init"] + params["b_init"])
    init_x = h
    for i in range(num_layers):
        beta = beta_base if fix_beta else math.log(beta_base / (i + 1) + 1.0)
        agg = adj_hat @ h
        support = (1.0 - alpha) * agg + alpha * init_x
        h = jax.nn.relu((1.0 - beta) * support + beta * (support @ params["w_layers"][i]))
    logits = h @ params["w_final"] + params["b_final"]
    return jax.nn.log_softmax(logits, axis=1)


if __name__ == "__main__":
    N = 64              # nodes
    IN_CH = 16
    HIDDEN = 32
    OUT_CH = 8
    NUM_LAYERS = 2
    ALPHA = 0.1
    BETA_BASE = 0.5
    NUM_EDGES = 128

    key = jax.random.PRNGKey(0)
    k_x, k_e, k_p = jax.random.split(key, 3)

    x = jax.random.normal(k_x, (N, IN_CH), jnp.float32)
    edge_index = jax.random.randint(k_e, (2, NUM_EDGES), 0, N, jnp.int32)
    adj_hat = build_normalized_adjacency(edge_index, N)

    params = init_params(k_p, IN_CH, HIDDEN, OUT_CH, NUM_LAYERS)

    out = scale_gcn_forward(x, adj_hat, params,
                            num_layers=NUM_LAYERS,
                            alpha=ALPHA,
                            beta_base=BETA_BASE)
    out = jax.block_until_ready(out)

    assert out.shape == (N, OUT_CH)

    # log_softmax rows must (log-)sum to ~0
    row_logsumexp = jax.scipy.special.logsumexp(out, axis=1)
    assert jnp.max(jnp.abs(row_logsumexp)) < 1e-4

    # Compare against pure-JAX f32 reference (loose tol for bf16 matmuls).
    ref = scale_gcn_reference(x, adj_hat, params,
                              num_layers=NUM_LAYERS,
                              alpha=ALPHA,
                              beta_base=BETA_BASE)
    max_err = float(jnp.max(jnp.abs(out - ref)))
    assert max_err < 0.1, f"max abs error vs reference: {max_err}"

    print("KERNEL_OK")
</pallas_src>

<mosaic_0001>
module attributes {stable_mosaic.version = 11 : i64} {
  func.func @_init_kernel(%arg0: i32, %arg1: memref<128x128xbf16, #tpu.memory_space<vmem>>, %arg2: memref<128x128xbf16, #tpu.memory_space<vmem>>, %arg3: memref<1x128xf32, #tpu.memory_space<vmem>>, %arg4: memref<128x128xbf16, #tpu.memory_space<vmem>>) attributes {dimension_semantics = [#tpu.dimension_semantics<parallel>], iteration_bounds = array<i64: 1>, scalar_prefetch = 0 : i64, scratch_operands = 0 : i64, tpu.core_type = #tpu.core_type<tc>, window_params = [{transform_indices = @transform_0, window_bounds = array<i64: 128, 128>}, {pipeline_mode = #tpu.pipeline_mode<synchronous>, transform_indices = @transform_1, window_bounds = array<i64: 128, 128>}, {pipeline_mode = #tpu.pipeline_mode<synchronous>, transform_indices = @transform_2, window_bounds = array<i64: 1, 128>}, {transform_indices = @transform_3, window_bounds = array<i64: 128, 128>}]} {
    %c0 = arith.constant 0 : index
    %c0_0 = arith.constant 0 : index
    %0 = vector.load %arg1[%c0, %c0_0] : memref<128x128xbf16, #tpu.memory_space<vmem>>, vector<128x128xbf16>
    %c0_1 = arith.constant 0 : index
    %c0_2 = arith.constant 0 : index
    %1 = vector.load %arg2[%c0_1, %c0_2] : memref<128x128xbf16, #tpu.memory_space<vmem>>, vector<128x128xbf16>
    %cst = arith.constant dense<0.000000e+00> : vector<128x128xf32>
    %2 = tpu.matmul %0, %1, %cst {dimension_numbers = #tpu.dot_dimension_numbers<[1], [0], [0], [1], [0, 0, 1, 1], [], []>} : vector<128x128xbf16>, vector<128x128xbf16>, vector<128x128xf32> -> vector<128x128xf32>
    %c0_3 = arith.constant 0 : index
    %c0_4 = arith.constant 0 : index
    %3 = vector.load %arg3[%c0_3, %c0_4] : memref<1x128xf32, #tpu.memory_space<vmem>>, vector<1x128xf32>
    %4 = vector.broadcast %3 : vector<1x128xf32> to vector<128x128xf32>
    %5 = arith.addf %2, %4 : vector<128x128xf32>
    %cst_5 = arith.constant 0.000000e+00 : f32
    %6 = vector.broadcast %cst_5 : f32 to vector<128x128xf32>
    %7 = arith.maximumf %5, %6 : vector<128x128xf32>
    %8 = arith.truncf %7 : vector<128x128xf32> to vector<128x128xbf16>
    %c0_6 = arith.constant 0 : index
    %c0_7 = arith.constant 0 : index
    %9 = vector.load %arg4[%c0_6, %c0_7] : memref<128x128xbf16, #tpu.memory_space<vmem>>, vector<128x128xbf16>
    tpu.vector_store %arg4[%c0_6, %c0_7], %8 {strides = array<i32>} : memref<128x128xbf16, #tpu.memory_space<vmem>>, vector<128x128xbf16>,
    return
  }
  func.func @transform_0(%arg0: i32) -> (i32, i32) {
    %c0_i32 = arith.constant 0 : i32
    %c0_i32_0 = arith.constant 0 : i32
    return %arg0, %c0_i32 : i32, i32
  }
  func.func @transform_1(%arg0: i32) -> (i32, i32) {
    %c0_i32 = arith.constant 0 : i32
    %c0_i32_0 = arith.constant 0 : i32
    %c0_i32_1 = arith.constant 0 : i32
    return %c0_i32, %c0_i32_0 : i32, i32
  }
  func.func @transform_2(%arg0: i32) -> (i32, i32) {
    %c0_i32 = arith.constant 0 : i32
    %c0_i32_0 = arith.constant 0 : i32
    %c0_i32_1 = arith.constant 0 : i32
    return %c0_i32, %c0_i32_0 : i32, i32
  }
  func.func @transform_3(%arg0: i32) -> (i32, i32) {
    %c0_i32 = arith.constant 0 : i32
    %c0_i32_0 = arith.constant 0 : i32
    return %arg0, %c0_i32 : i32, i32
  }
}

</mosaic_0001>

<llo_original>
// kernel: tpu_custom_call.1
$region0: #{tpu_custom_call.1}
  #allocation0 [shape = 'u32[]', space=smem, size = 0x4, offset = 0x4, fixed_abs, tag = 'smem constant byte address 0x4 - core index']
  #allocation1 [shape = 'u32[144,128]{1,0:T(1,128)}', space=vmem, size = 0x12000, scoped, tag = 'internal scratch']
  %s0 = inlined_call_operand.hbm [shape: bf16[128,128], index: 0, kind: input, shape index: {}]
  %s1 = inlined_call_operand.hbm [shape: bf16[128,128], index: 1, kind: input, shape index: {}]
  %s2 = inlined_call_operand.vmem [shape: f32[1,128], index: 2, kind: input, shape index: {}]
  %s3 = inlined_call_operand.hbm [shape: bf16[128,128], index: 3, kind: output, shape index: {}]
  %s4 = sld [smem:[#allocation0]]
  $region30: #{tpu_custom_call.1} parent=0
    _
  %s6 = ssub.s32 1, %s4
  %s7 = scalar_select 0, %s6, %s4
  $region1: #{tpu_custom_call.1} parent=0
    #allocation2 [shape = 'u8[32768]{0}', space=vmem, size = 0x8000, scoped, tag = 'input window, operand 0, single buffered']
    #allocation3 [shape = 's32[1]{0}', space=sflag, size = 0x4, scoped, tag = 'scoped memory for tpu_custom_call.1']
    #allocation4 [shape = 's32[1]{0}', space=sflag, size = 0x4, scoped, tag = 'scoped memory for tpu_custom_call.1']
    #allocation5 [shape = 'u8[32768]{0}', space=vmem, size = 0x8000, scoped, tag = 'input window, operand 1, single buffered']
    #allocation6 [shape = 's32[1]{0}', space=sflag, size = 0x4, scoped, tag = 'scoped memory for tpu_custom_call.1']
    #allocation7 [shape = 'u8[32768]{0}', space=vmem, size = 0x8000, scoped, tag = 'output window, operand 0, single buffered']
    %8 = vsyncpa [#allocation3], 0
    %9 = vsyncpa [#allocation6], 0
    %10 = vsyncpa [#allocation4], 0
    // Predicated region
    $region2: #{tpu_custom_call.1} parent=1 // pred_check
      _
    $region3: #{tpu_custom_call.1} parent=1 // pred_check_branch
      %12 = sbr.rel (0) target = $region5
    $region4: #{tpu_custom_call.1} parent=1 // pred_region
      %s14 = ssub.s32 1024, 1024
      %15 = vsyncadd [#allocation3], %s14
      %s16 = sshll.u32 [#allocation2], 4
      %s17 = int_to_ptr.vmem [resolvable:$true] %s16
      %22 = dma.hbm_to_vmem [thread:$0]  %s0, 1024, %s17, [#allocation3], 64, 64, 4
    $region5: #{tpu_custom_call.1} parent=1 // pred_fallthru
      _
    // Predicated region
    $region6: #{tpu_custom_call.1} parent=1 // pred_check
      _
    $region7: #{tpu_custom_call.1} parent=1 // pred_check_branch
      %24 = sbr.rel (0) target = $region9
    $region8: #{tpu_custom_call.1} parent=1 // pred_region
      %s26 = ssub.s32 1024, 1024
      %27 = vsyncadd [#allocation6], %s26
      %s28 = sshll.u32 [#allocation5], 4
      %s29 = int_to_ptr.vmem [resolvable:$true] %s28
      %34 = dma.hbm_to_vmem [thread:$0]  %s1, 1024, %s29, [#allocation6], 64, 64, 4
    $region9: #{tpu_custom_call.1} parent=1 // pred_fallthru
      _
    // Predicated region
    $region10: #{tpu_custom_call.1} parent=1 // pred_check
      _
    $region11: #{tpu_custom_call.1} parent=1 // pred_check_branch
      %36 = sbr.rel (0) target = $region13
    $region12: #{tpu_custom_call.1} parent=1 // pred_region
      _
    $region13: #{tpu_custom_call.1} parent=1 // pred_fallthru
      _
    // Predicated region
    $region14: #{tpu_custom_call.1} parent=1 // pred_check
      _
    $region15: #{tpu_custom_call.1} parent=1 // pred_check_branch
      %38 = sbr.rel (0) target = $region17
    $region16: #{tpu_custom_call.1} parent=1 // pred_region
      %39 = dma.done [#allocation3], 1024
    $region17: #{tpu_custom_call.1} parent=1 // pred_fallthru
      _
    // Predicated region
    $region18: #{tpu_custom_call.1} parent=1 // pred_check
      _
    $region19: #{tpu_custom_call.1} parent=1 // pred_check_branch
      %41 = sbr.rel (0) target = $region21
    $region20: #{tpu_custom_call.1} parent=1 // pred_region
      %42 = dma.done [#allocation6], 1024
    $region21: #{tpu_custom_call.1} parent=1 // pred_fallthru
      _
    %v44 = vld [vmem:[#allocation2] sm:$0xf]
    %v45 = vld [vmem:[#allocation2 + $0x4] sm:$0xf]
    %v46 = vld [vmem:[#allocation2 + $0x8] sm:$0xf]
    %v47 = vld [vmem:[#allocation2 + $0xc] sm:$0xf]
    %v48 = vld [vmem:[#allocation2 + $0x10] sm:$0xf]
    %v49 = vld [vmem:[#allocation2 + $0x14] sm:$0xf]
    %v50 = vld [vmem:[#allocation2 + $0x18] sm:$0xf]
    %v51 = vld [vmem:[#allocation2 + $0x1c] sm:$0xf]
    %v52 = vld [vmem:[#allocation2 + $0x20] sm:$0xf]
    %v53 = vld [vmem:[#allocation2 + $0x24] sm:$0xf]
    %v54 = vld [vmem:[#allocation2 + $0x28] sm:$0xf]
    %v55 = vld [vmem:[#allocation2 + $0x2c] sm:$0xf]
    %v56 = vld [vmem:[#allocation2 + $0x30] sm:$0xf]
    %v57 = vld [vmem:[#allocation2 + $0x34] sm:$0xf]
    %v58 = vld [vmem:[#allocation2 + $0x38] sm:$0xf]
    %v59 = vld [vmem:[#allocation2 + $0x3c] sm:$0xf]
    %v60 = vld [vmem:[#allocation5] sm:$0xf]
    %v61 = vld [vmem:[#allocation5 + $0x4] sm:$0xf]
    %v62 = vld [vmem:[#allocation5 + $0x8] sm:$0xf]
    %v63 = vld [vmem:[#allocation5 + $0xc] sm:$0xf]
    %v64 = vld [vmem:[#allocation5 + $0x10] sm:$0xf]
    %v65 = vld [vmem:[#allocation5 + $0x14] sm:$0xf]
    %v66 = vld [vmem:[#allocation5 + $0x18] sm:$0xf]
    %v67 = vld [vmem:[#allocation5 + $0x1c] sm:$0xf]
    %v68 = vld [vmem:[#allocation5 + $0x20] sm:$0xf]
    %v69 = vld [vmem:[#allocation5 + $0x24] sm:$0xf]
    %v70 = vld [vmem:[#allocation5 + $0x28] sm:$0xf]
    %v71 = vld [vmem:[#allocation5 + $0x2c] sm:$0xf]
    %v72 = vld [vmem:[#allocation5 + $0x30] sm:$0xf]
    %v73 = vld [vmem:[#allocation5 + $0x34] sm:$0xf]
    %v74 = vld [vmem:[#allocation5 + $0x38] sm:$0xf]
    %v75 = vld [vmem:[#allocation5 + $0x3c] sm:$0xf]
    %v76 = vld [vmem:[%s2] sm:$0x1]
    %v78 = vlaneseq
    %v79 = vshrl.u32 %v78, 7
    %v80 = vsub.s32 0, %v79
    %v81 = vrot.slane %v76, %v80
    %v99 = vunpack.c.l.b16 %v44
    %v100 = vunpack.c.l.b16 %v45
    %v101 = vunpack.c.l.b16 %v46
    %v102 = vunpack.c.l.b16 %v47
    %v103 = vunpack.c.l.b16 %v48
    %v104 = vunpack.c.l.b16 %v49
    %v105 = vunpack.c.l.b16 %v50
    %v106 = vunpack.c.l.b16 %v51
    %v107 = vunpack.c.l.b16 %v52
    %v108 = vunpack.c.l.b16 %v53
    %v109 = vunpack.c.l.b16 %v54
    %v110 = vunpack.c.l.b16 %v55
    %v111 = vunpack.c.l.b16 %v56
    %v112 = vunpack.c.l.b16 %v57
    %v113 = vunpack.c.l.b16 %v58
    %v114 = vunpack.c.l.b16 %v59
    %v115 = vpack.c.b16 %v100, %v99
    %v116 = vpack.c.b16 %v102, %v101
    %v117 = vpack.c.b16 %v104, %v103
    %v118 = vpack.c.b16 %v106, %v105
    %v119 = vpack.c.b16 %v108, %v107
    %v120 = vpack.c.b16 %v110, %v109
    %v121 = vpack.c.b16 %v112, %v111
    %v122 = vpack.c.b16 %v114, %v113
    %v147 = vunpack.c.l.b16 %v60
    %v148 = vunpack.c.l.b16 %v61
    %v149 = vunpack.c.l.b16 %v62
    %v150 = vunpack.c.l.b16 %v63
    %v151 = vunpack.c.l.b16 %v64
    %v152 = vunpack.c.l.b16 %v65
    %v153 = vunpack.c.l.b16 %v66
    %v154 = vunpack.c.l.b16 %v67
    %v155 = vunpack.c.l.b16 %v68
    %v156 = vunpack.c.l.b16 %v69
    %v157 = vunpack.c.l.b16 %v70
    %v158 = vunpack.c.l.b16 %v71
    %v159 = vunpack.c.l.b16 %v72
    %v160 = vunpack.c.l.b16 %v73
    %v161 = vunpack.c.l.b16 %v74
    %v162 = vunpack.c.l.b16 %v75
    %v163 = vpack.c.b16 %v148, %v147
    %v164 = vpack.c.b16 %v150, %v149
    %v165 = vpack.c.b16 %v152, %v151
    %v166 = vpack.c.b16 %v154, %v153
    %v167 = vpack.c.b16 %v156, %v155
    %v168 = vpack.c.b16 %v158, %v157
    %v169 = vpack.c.b16 %v160, %v159
    %v170 = vpack.c.b16 %v162, %v161
    %179 = vmatprep.subr.bf16.mxu0 0
    %180 = vmatpush1.bf16.msra.mxu0 %v163
    %181 = vmatprep.subr.bf16.mxu0 0
    %182 = vmatpush1.bf16.msra.mxu0 %v164
    %183 = vmatprep.subr.bf16.mxu0 0
    %184 = vmatpush1.bf16.msra.mxu0 %v165
    %185 = vmatprep.subr.bf16.mxu0 0
    %186 = vmatpush1.bf16.msra.mxu0 %v166
    %187 = vmatprep.subr.bf16.mxu0 0
    %188 = vmatpush1.bf16.msra.mxu0 %v167
    %189 = vmatprep.subr.bf16.mxu0 0
    %190 = vmatpush1.bf16.msra.mxu0 %v168
    %191 = vmatprep.subr.bf16.mxu0 0
    %192 = vmatpush1.bf16.msra.mxu0 %v169
    %193 = vmatprep.subr.bf16.mxu0 0
    %194 = vmatpush1.bf16.msra.mxu0 %v170
    %195 = vmatprep.subr.bf16.mxu0 0
    %196 = vmatpush1.bf16.msra.mxu0 0
    %197 = vmatprep.subr.bf16.mxu0 0
    %198 = vmatpush1.bf16.msra.mxu0 0
    %199 = vmatprep.subr.bf16.mxu0 0
    %200 = vmatpush1.bf16.msra.mxu0 0
    %201 = vmatprep.subr.bf16.mxu0 0
    %202 = vmatpush1.bf16.msra.mxu0 0
    %203 = vmatprep.subr.bf16.mxu0 0
    %204 = vmatpush1.bf16.msra.mxu0 0
    %205 = vmatprep.subr.bf16.mxu0 0
    %206 = vmatpush1.bf16.msra.mxu0 0
    %207 = vmatprep.subr.bf16.mxu0 0
    %208 = vmatpush1.bf16.msra.mxu0 0
    %209 = vmatprep.subr.bf16.mxu0 0
    %210 = vmatpush1.bf16.msra.mxu0 0
    %211 = vmatprep.mubr.bf16.mxu0 0
    %212 = vmatmul.mubr.bf16.gmra.mrb[0].mxu0 %v115
    %v213 = vpop.f32.mrb[0].mxu0
    %v214 = vadd.f32 %v81, %v213
    %v215 = vpop.f32.mrb[0].mxu0
    %v216 = vpop.f32.mrb[0].mxu0
    %v217 = vadd.f32 %v81, %v216
    %v218 = vpop.f32.mrb[0].mxu0
    %219 = vmatprep.mubr.bf16.mxu0 0
    %220 = vmatmul.mubr.bf16.gmra.mrb[0].mxu0 %v116
    %v221 = vpop.f32.mrb[0].mxu0
    %v222 = vadd.f32 %v81, %v221
    %v223 = vpop.f32.mrb[0].mxu0
    %v224 = vpop.f32.mrb[0].mxu0
    %v225 = vadd.f32 %v81, %v224
    %v226 = vpop.f32.mrb[0].mxu0
    %227 = vmatprep.mubr.bf16.mxu0 0
    %228 = vmatmul.mubr.bf16.gmra.mrb[0].mxu0 %v117
    %v229 = vpop.f32.mrb[0].mxu0
    %v230 = vadd.f32 %v81, %v229
    %v231 = vpop.f32.mrb[0].mxu0
    %v232 = vpop.f32.mrb[0].mxu0
    %v233 = vadd.f32 %v81, %v232
    %v234 = vpop.f32.mrb[0].mxu0
    %235 = vmatprep.mubr.bf16.mxu0 0
    %236 = vmatmul.mubr.bf16.gmra.mrb[0].mxu0 %v118
    %v237 = vpop.f32.mrb[0].mxu0
    %v238 = vadd.f32 %v81, %v237
    %v239 = vpop.f32.mrb[0].mxu0
    %v240 = vpop.f32.mrb[0].mxu0
    %v241 = vadd.f32 %v81, %v240
    %v242 = vpop.f32.mrb[0].mxu0
    %243 = vmatprep.mubr.bf16.mxu0 0
    %244 = vmatmul.mubr.bf16.gmra.mrb[0].mxu0 %v119
    %v245 = vpop.f32.mrb[0].mxu0
    %v246 = vadd.f32 %v81, %v245
    %v247 = vpop.f32.mrb[0].mxu0
    %v248 = vpop.f32.mrb[0].mxu0
    %v249 = vadd.f32 %v81, %v248
    %v250 = vpop.f32.mrb[0].mxu0
    %251 = vmatprep.mubr.bf16.mxu0 0
    %252 = vmatmul.mubr.bf16.gmra.mrb[0].mxu0 %v120
    %v253 = vpop.f32.mrb[0].mxu0
    %v254 = vadd.f32 %v81, %v253
    %v255 = vpop.f32.mrb[0].mxu0
    %v256 = vpop.f32.mrb[0].mxu0
    %v257 = vadd.f32 %v81, %v256
    %v258 = vpop.f32.mrb[0].mxu0
    %259 = vmatprep.mubr.bf16.mxu0 0
    %260 = vmatmul.mubr.bf16.gmra.mrb[0].mxu0 %v121
    %v261 = vpop.f32.mrb[0].mxu0
    %v262 = vadd.f32 %v81, %v261
    %v263 = vpop.f32.mrb[0].mxu0
    %v264 = vpop.f32.mrb[0].mxu0
    %v265 = vadd.f32 %v81, %v264
    %v266 = vpop.f32.mrb[0].mxu0
    %267 = vmatprep.mubr.bf16.mxu0 0
    %268 = vmatmul.mubr.bf16.gmra.mrb[0].mxu0 %v122
    %v269 = vpop.f32.mrb[0].mxu0
    %v270 = vadd.f32 %v81, %v269
    %v271 = vpop.f32.mrb[0].mxu0
    %v272 = vpop.f32.mrb[0].mxu0
    %v273 = vadd.f32 %v81, %v272
    %v274 = vpop.f32.mrb[0].mxu0
    %275 = vdwg.mxu0
    %v276 = vmax.f32 %v214, 0.0
    %v277 = vmax.f32 %v217, 0.0
    %v278 = vmax.f32 %v222, 0.0
    %v279 = vmax.f32 %v225, 0.0
    %v280 = vmax.f32 %v230, 0.0
    %v281 = vmax.f32 %v233, 0.0
    %v282 = vmax.f32 %v238, 0.0
    %v283 = vmax.f32 %v241, 0.0
    %v284 = vmax.f32 %v246, 0.0
    %v285 = vmax.f32 %v249, 0.0
    %v286 = vmax.f32 %v254, 0.0
    %v287 = vmax.f32 %v257, 0.0
    %v288 = vmax.f32 %v262, 0.0
    %v289 = vmax.f32 %v265, 0.0
    %v290 = vmax.f32 %v270, 0.0
    %v291 = vmax.f32 %v273, 0.0
    %v292 = vpack.c.bf16 %v277, %v276
    %v293 = vpack.c.bf16 %v279, %v278
    %v294 = vpack.c.bf16 %v281, %v280
    %v295 = vpack.c.bf16 %v283, %v282
    %v296 = vpack.c.bf16 %v285, %v284
    %v297 = vpack.c.bf16 %v287, %v286
    %v298 = vpack.c.bf16 %v289, %v288
    %v299 = vpack.c.bf16 %v291, %v290
    %v308 = vunpack.c.l.b16 %v292
    %v309 = vunpack.c.h.b16 %v292
    %v310 = vunpack.c.l.b16 %v293
    %v311 = vunpack.c.h.b16 %v293
    %v312 = vunpack.c.l.b16 %v294
    %v313 = vunpack.c.h.b16 %v294
    %v314 = vunpack.c.l.b16 %v295
    %v315 = vunpack.c.h.b16 %v295
    %v316 = vunpack.c.l.b16 %v296
    %v317 = vunpack.c.h.b16 %v296
    %v318 = vunpack.c.l.b16 %v297
    %v319 = vunpack.c.h.b16 %v297
    %v320 = vunpack.c.l.b16 %v298
    %v321 = vunpack.c.h.b16 %v298
    %v322 = vunpack.c.l.b16 %v299
    %v323 = vunpack.c.h.b16 %v299
    %v324 = vpack.c.b16 %v308, %v308
    %v325 = vpack.c.b16 %v309, %v309
    %v326 = vpack.c.b16 %v310, %v310
    %v327 = vpack.c.b16 %v311, %v311
    %v328 = vpack.c.b16 %v312, %v312
    %v329 = vpack.c.b16 %v313, %v313
    %v330 = vpack.c.b16 %v314, %v314
    %v331 = vpack.c.b16 %v315, %v315
    %v332 = vpack.c.b16 %v316, %v316
    %v333 = vpack.c.b16 %v317, %v317
    %v334 = vpack.c.b16 %v318, %v318
    %v335 = vpack.c.b16 %v319, %v319
    %v336 = vpack.c.b16 %v320, %v320
    %v337 = vpack.c.b16 %v321, %v321
    %v338 = vpack.c.b16 %v322, %v322
    %v339 = vpack.c.b16 %v323, %v323
    %356 = vst [vmem:[#allocation7] sm:$0xf] %v324
    %357 = vst [vmem:[#allocation7 + $0x4] sm:$0xf] %v325
    %358 = vst [vmem:[#allocation7 + $0x8] sm:$0xf] %v326
    %359 = vst [vmem:[#allocation7 + $0xc] sm:$0xf] %v327
    %360 = vst [vmem:[#allocation7 + $0x10] sm:$0xf] %v328
    %361 = vst [vmem:[#allocation7 + $0x14] sm:$0xf] %v329
    %362 = vst [vmem:[#allocation7 + $0x18] sm:$0xf] %v330
    %363 = vst [vmem:[#allocation7 + $0x1c] sm:$0xf] %v331
    %364 = vst [vmem:[#allocation7 + $0x20] sm:$0xf] %v332
    %365 = vst [vmem:[#allocation7 + $0x24] sm:$0xf] %v333
    %366 = vst [vmem:[#allocation7 + $0x28] sm:$0xf] %v334
    %367 = vst [vmem:[#allocation7 + $0x2c] sm:$0xf] %v335
    %368 = vst [vmem:[#allocation7 + $0x30] sm:$0xf] %v336
    %369 = vst [vmem:[#allocation7 + $0x34] sm:$0xf] %v337
    %370 = vst [vmem:[#allocation7 + $0x38] sm:$0xf] %v338
    %371 = vst [vmem:[#allocation7 + $0x3c] sm:$0xf] %v339
    // Predicated region
    $region22: #{tpu_custom_call.1} parent=1 // pred_check
      _
    $region23: #{tpu_custom_call.1} parent=1 // pred_check_branch
      %373 = sbr.rel (0) target = $region25
    $region24: #{tpu_custom_call.1} parent=1 // pred_region
      %s375 = ssub.s32 1024, 1024
      %376 = vsyncadd [#allocation4], %s375
      %s377 = sshll.u32 [#allocation7], 4
      %s378 = int_to_ptr.vmem [resolvable:$true] %s377
      %383 = dma.vmem_to_hbm [thread:$0]  %s378, 1024, %s3, [#allocation4], 64, 64, 4
    $region25: #{tpu_custom_call.1} parent=1 // pred_fallthru
      _
    // Predicated region
    $region26: #{tpu_custom_call.1} parent=1 // pred_check
      _
    $region27: #{tpu_custom_call.1} parent=1 // pred_check_branch
      %385 = sbr.rel (0) target = $region29
    $region28: #{tpu_custom_call.1} parent=1 // pred_region
      %386 = dma.done [#allocation4], 1024
    $region29: #{tpu_custom_call.1} parent=1 // pred_fallthru
      _
    %387 = vsyncpa [#allocation3], 1
    %388 = vsyncpa [#allocation6], 1
    %389 = vsyncpa [#allocation4], 1

</llo_original>
